<compile_context>
chip_gen: v6e
topology: v6e:2x2x1
jax: 0.10.0
libtpu: 0.0.40
codegen_flags: <defaults>
</compile_context>

<pallas_src>
import functools

import jax
import jax.numpy as jnp
from jax.experimental import pallas as pl
from jax.experimental.pallas import tpu as pltpu


# ----------------------------------------------------------------------------- kernel
def _layernorm_kernel(x_ref, g_ref, b_ref, o_ref, *, eps):
    # x_ref block: (C, TL); reduction over channels = sublane axis,
    # spatial tokens occupy the full 128-lane axis (lane-dense loads/stores).
    x = x_ref[...].astype(jnp.float32)                    # (C, TL), f32 accumulation
    mu = jnp.mean(x, axis=0, keepdims=True)               # (1, TL)
    xc = x - mu
    var = jnp.mean(xc * xc, axis=0, keepdims=True)        # biased variance, (1, TL)
    inv = jax.lax.rsqrt(var + eps)                        # EUP slot (co-issues with VPU)
    g = g_ref[...].astype(jnp.float32)                    # (C, 1), resident across grid
    b = b_ref[...].astype(jnp.float32)                    # (C, 1)
    o_ref[...] = ((xc * inv) * g + b).astype(o_ref.dtype)


# ----------------------------------------------------------------------------- wrapper
def layernorm_nchw(x, weight, bias, *, eps=1e-6,
                   target_block_bytes=2 << 20, min_grid_steps=8):
    """LayerNorm over the channel dim of an NCHW tensor (matches FDAT LayerNorm)."""
    B, C, H, W = x.shape
    L = H * W
    xr = x.reshape(B, C, L)

    itemsize = jnp.dtype(x.dtype).itemsize

    # Largest lane tile (multiple of 128) that keeps one input block around
    # target_block_bytes — dtype-aware, so bf16 inputs get 2x the lanes.
    max_tl = max(128, (target_block_bytes // (C * itemsize)) // 128 * 128)
    # No point exceeding the (128-padded) row length.
    padded_l = pl.cdiv(L, 128) * 128
    # Cap so the grid has enough steps for prefetch/writeback overlap and for
    # both TensorCores on v7x to receive work.
    steps_per_batch = max(1, pl.cdiv(min_grid_steps, B))
    tl_cap = pl.cdiv(pl.cdiv(L, steps_per_batch), 128) * 128
    tl = max(128, min(max_tl, padded_l, tl_cap))

    grid = (B, pl.cdiv(L, tl))        # masked partial last block; no divide-L search
    g2 = weight.reshape(C, 1)
    b2 = bias.reshape(C, 1)

    cost = pl.CostEstimate(
        flops=8 * B * C * L,
        transcendentals=B * L,
        bytes_accessed=2 * B * C * L * itemsize + 2 * C * weight.dtype.itemsize,
    )

    out = pl.pallas_call(
        functools.partial(_layernorm_kernel, eps=eps),
        out_shape=jax.ShapeDtypeStruct((B, C, L), x.dtype),
        grid=grid,
        in_specs=[
            # Leading batch dim squeezed -> kernel sees (C, tl) directly.
            pl.BlockSpec((None, C, tl), lambda bi, li: (bi, 0, li)),
            pl.BlockSpec((C, 1), lambda bi, li: (0, 0)),   # constant index -> resident
            pl.BlockSpec((C, 1), lambda bi, li: (0, 0)),
        ],
        out_specs=pl.BlockSpec((None, C, tl), lambda bi, li: (bi, 0, li)),
        compiler_params=pltpu.CompilerParams(
            # Independent tokens on both axes; default "parallel" shards the
            # grid across TensorCores on multi-TC parts (v7x).
            dimension_semantics=("parallel", "parallel")),
        cost_estimate=cost,
    )(xr, g2, b2)
    return out.reshape(B, C, H, W)


# ----------------------------------------------------------------------------- reference
def _layernorm_ref(x, weight, bias, eps=1e-6):
    x32 = x.astype(jnp.float32)
    u = jnp.mean(x32, axis=1, keepdims=True)
    s = jnp.mean((x32 - u) ** 2, axis=1, keepdims=True)
    xn = (x32 - u) / jnp.sqrt(s + eps)
    out = weight[None, :, None, None] * xn + bias[None, :, None, None]
    return out.astype(x.dtype)


# ----------------------------------------------------------------------------- main
if __name__ == "__main__":
    B, C, H, W = 2, 4, 16, 16

    key = jax.random.PRNGKey(0)
    kx, kw, kb = jax.random.split(key, 3)
    x = jax.random.normal(kx, (B, C, H, W), jnp.float32)
    weight = 1.0 + 0.1 * jax.random.normal(kw, (C,), jnp.float32)
    bias = 0.1 * jax.random.normal(kb, (C,), jnp.float32)

    out = layernorm_nchw(x, weight, bias, eps=1e-6)
    out = jax.block_until_ready(out)

    ref = _layernorm_ref(x, weight, bias, eps=1e-6)
    assert out.shape == (B, C, H, W)
    assert bool(jnp.all(jnp.isfinite(out)))
    assert bool(jnp.allclose(out, ref, atol=1e-5, rtol=1e-5))
    print("KERNEL_OK")
</pallas_src>

<mosaic_0001>
module attributes {stable_mosaic.version = 11 : i64} {
  func.func @_layernorm_kernel(%arg0: i32, %arg1: i32, %arg2: memref<1x4x128xf32, #tpu.memory_space<vmem>>, %arg3: memref<4x1xf32, #tpu.memory_space<vmem>>, %arg4: memref<4x1xf32, #tpu.memory_space<vmem>>, %arg5: memref<1x4x128xf32, #tpu.memory_space<vmem>>) attributes {dimension_semantics = [#tpu.dimension_semantics<parallel>, #tpu.dimension_semantics<parallel>], iteration_bounds = array<i64: 2, 2>, scalar_prefetch = 0 : i64, scratch_operands = 0 : i64, tpu.core_type = #tpu.core_type<tc>, window_params = [{transform_indices = @transform_0, window_bounds = array<i64: 1, 4, 128>}, {pipeline_mode = #tpu.pipeline_mode<synchronous>, transform_indices = @transform_1, window_bounds = array<i64: 4, 1>}, {pipeline_mode = #tpu.pipeline_mode<synchronous>, transform_indices = @transform_2, window_bounds = array<i64: 4, 1>}, {transform_indices = @transform_3, window_bounds = array<i64: 1, 4, 128>}]} {
    %c0 = arith.constant 0 : index
    %c0_0 = arith.constant 0 : index
    %c0_1 = arith.constant 0 : index
    %0 = vector.load %arg2[%c0, %c0_0, %c0_1] : memref<1x4x128xf32, #tpu.memory_space<vmem>>, vector<1x4x128xf32>
    %1 = vector.shape_cast %0 : vector<1x4x128xf32> to vector<4x128xf32>
    %cst = arith.constant dense<0.000000e+00> : vector<128xf32>
    %2 = vector.multi_reduction <add>, %1, %cst [0] : vector<4x128xf32> to vector<128xf32>
    %3 = vector.shape_cast %2 : vector<128xf32> to vector<1x128xf32>
    %cst_2 = arith.constant 4.000000e+00 : f32
    %4 = vector.broadcast %cst_2 : f32 to vector<1x128xf32>
    %5 = arith.divf %3, %4 : vector<1x128xf32>
    %6 = vector.broadcast %5 : vector<1x128xf32> to vector<4x128xf32>
    %7 = arith.subf %1, %6 : vector<4x128xf32>
    %8 = arith.mulf %7, %7 : vector<4x128xf32>
    %cst_3 = arith.constant dense<0.000000e+00> : vector<128xf32>
    %9 = vector.multi_reduction <add>, %8, %cst_3 [0] : vector<4x128xf32> to vector<128xf32>
    %10 = vector.shape_cast %9 : vector<128xf32> to vector<1x128xf32>
    %cst_4 = arith.constant 4.000000e+00 : f32
    %11 = vector.broadcast %cst_4 : f32 to vector<1x128xf32>
    %12 = arith.divf %10, %11 : vector<1x128xf32>
    %cst_5 = arith.constant 9.99999997E-7 : f32
    %13 = vector.broadcast %cst_5 : f32 to vector<1x128xf32>
    %14 = arith.addf %12, %13 : vector<1x128xf32>
    %15 = math.rsqrt %14 : vector<1x128xf32>
    %c0_6 = arith.constant 0 : index
    %c0_7 = arith.constant 0 : index
    %16 = vector.load %arg3[%c0_6, %c0_7] : memref<4x1xf32, #tpu.memory_space<vmem>>, vector<4x1xf32>
    %c0_8 = arith.constant 0 : index
    %c0_9 = arith.constant 0 : index
    %17 = vector.load %arg4[%c0_8, %c0_9] : memref<4x1xf32, #tpu.memory_space<vmem>>, vector<4x1xf32>
    %18 = vector.broadcast %15 : vector<1x128xf32> to vector<4x128xf32>
    %19 = arith.mulf %7, %18 : vector<4x128xf32>
    %20 = vector.broadcast %16 : vector<4x1xf32> to vector<4x128xf32>
    %21 = arith.mulf %19, %20 : vector<4x128xf32>
    %22 = vector.broadcast %17 : vector<4x1xf32> to vector<4x128xf32>
    %23 = arith.addf %21, %22 : vector<4x128xf32>
    %c0_10 = arith.constant 0 : index
    %c0_11 = arith.constant 0 : index
    %c0_12 = arith.constant 0 : index
    %24 = vector.load %arg5[%c0_10, %c0_11, %c0_12] : memref<1x4x128xf32, #tpu.memory_space<vmem>>, vector<1x4x128xf32>
    %25 = vector.shape_cast %24 : vector<1x4x128xf32> to vector<4x128xf32>
    %26 = vector.shape_cast %23 : vector<4x128xf32> to vector<1x4x128xf32>
    tpu.vector_store %arg5[%c0_10, %c0_11, %c0_12], %26 {strides = array<i32>} : memref<1x4x128xf32, #tpu.memory_space<vmem>>, vector<1x4x128xf32>,
    return
  }
  func.func @transform_0(%arg0: i32, %arg1: i32) -> (i32, i32, i32) {
    %c0_i32 = arith.constant 0 : i32
    %c0_i32_0 = arith.constant 0 : i32
    return %arg0, %c0_i32, %arg1 : i32, i32, i32
  }
  func.func @transform_1(%arg0: i32, %arg1: i32) -> (i32, i32) {
    %c0_i32 = arith.constant 0 : i32
    %c0_i32_0 = arith.constant 0 : i32
    %c0_i32_1 = arith.constant 0 : i32
    return %c0_i32, %c0_i32_0 : i32, i32
  }
  func.func @transform_2(%arg0: i32, %arg1: i32) -> (i32, i32) {
    %c0_i32 = arith.constant 0 : i32
    %c0_i32_0 = arith.constant 0 : i32
    %c0_i32_1 = arith.constant 0 : i32
    return %c0_i32, %c0_i32_0 : i32, i32
  }
  func.func @transform_3(%arg0: i32, %arg1: i32) -> (i32, i32, i32) {
    %c0_i32 = arith.constant 0 : i32
    %c0_i32_0 = arith.constant 0 : i32
    return %arg0, %c0_i32, %arg1 : i32, i32, i32
  }
}

</mosaic_0001>

<llo_original>
// kernel: tpu_custom_call.1
$region0: #{tpu_custom_call.1}
  #allocation0 [shape = 'u32[]', space=smem, size = 0x4, offset = 0x4, fixed_abs, tag = 'smem constant byte address 0x4 - core index']
  #allocation1 [shape = 'u32[144,128]{1,0:T(1,128)}', space=vmem, size = 0x12000, scoped, tag = 'internal scratch']
  %s0 = inlined_call_operand.hbm [shape: f32[2,4,256], index: 0, kind: input, shape index: {}]
  %s1 = inlined_call_operand.vmem [shape: f32[4,1], index: 1, kind: input, shape index: {}]
  %s2 = inlined_call_operand.vmem [shape: f32[4,1], index: 2, kind: input, shape index: {}]
  %s3 = inlined_call_operand.hbm [shape: f32[2,4,256], index: 3, kind: output, shape index: {}]
  %s4 = sld [smem:[#allocation0]]
  $region49: #{tpu_custom_call.1} parent=0
    _
  %s6 = ssub.s32 1, %s4
  %s7 = scalar_select 0, %s6, %s4
  $region1: #{tpu_custom_call.1} parent=0
    #allocation2 [shape = 'u8[4096]{0}', space=vmem, size = 0x1000, scoped, tag = 'input window, operand 0']
    #allocation3 [shape = 's32[2]{0}', space=sflag, size = 0x8, scoped, tag = 'scoped memory for tpu_custom_call.1']
    #allocation4 [shape = 's32[2]{0}', space=sflag, size = 0x8, scoped, tag = 'scoped memory for tpu_custom_call.1']
    #allocation5 [shape = 'u8[4096]{0}', space=vmem, size = 0x1000, scoped, tag = 'output window, operand 0']
    %8 = vsyncpa [#allocation3], 0
    %s9 = scalar_lea.sflag [#allocation3], 1
    %10 = vsyncpa %s9, 0
    %11 = vsyncpa [#allocation4], 0
    %s12 = scalar_lea.sflag [#allocation4], 1
    %13 = vsyncpa %s12, 0
    loop: start=0, step=1, limit=6
    $region2: #{tpu_custom_call.1} parent=1 // loop_pre_header
      _
    $region3: #{tpu_custom_call.1} parent=1 // loop_header
      %s15 = sphi 0, %s19
      %p16 = scmp.ge.s32.totalorder %s15, 6
      %s22 = sphi 0, %s34
      %s23 = sphi 0, %s30
      %s24 = sphi 0, %s22
      %s25 = sphi 0, %s23
      %s26 = sphi 0, %s24
      %s27 = sphi 0, %s25
      %s39 = sphi 0, %s41
      %s42 = sphi 0, %s39
      %s43 = sphi 0, %s42
      %s59 = sphi 0, %s43
      %s63 = sphi 0, %s63
      %s65 = sphi 0, %s63
      %s66 = sphi 0, %s65
      %s80 = sphi 0, %s66
      %s84 = sphi 0, %s84
      %s86 = sphi 0, %s84
      %s87 = sphi 0, %s86
      %s101 = sphi 0, %s87
      %s109 = sphi 0, %s111
      %s112 = sphi 0, %s109
      %s113 = sphi 0, %s112
      %s129 = sphi 0, %s113
    $region4: #{tpu_custom_call.1} parent=1 // loop_header_branch
      %18 = sbr.rel (%p16) target = $region8
    $region5: #{tpu_custom_call.1} parent=1 // loop_body
      %s20 = ssub.s32 %s15, 1
      %s21 = ssub.s32 %s15, 2
      %s28 = sadd.s32 1, %s23
      %p29 = scmp.ge.s32.totalorder %s28, 2
      %s30 = scalar_select %p29, 0, %s28
      %s31 = sadd.s32 1, %s22
      %s32 = scalar_select %p29, %s31, %s22
      %p33 = scmp.ge.s32.totalorder %s32, 2
      %s34 = scalar_select %p33, 0, %s32
      %s35 = ssub.s32 %s22, %s34
      %s36 = ssub.s32 %s23, %s30
      %s37 = sor.u32 %s35, %s36
      %p38 = scmp.eq.s32.totalorder %s37, 0
      %s40 = sadd.s32 %s39, 1
      %s41 = scalar_select %p38, %s39, %s40
      %p44 = pneg %p38
      %p45 = scmp.eq.s32.totalorder %s15, 3
      %p46 = por %p44, %p45
      %p47 = scmp.ne.s32.totalorder %s39, %s42
      %p48 = scmp.eq.s32.totalorder %s15, 0
      %p49 = por %p47, %p48
      %p50 = scmp.ne.s32.totalorder %s39, %s42
      %p51 = scmp.eq.s32.totalorder %s20, 3
      %p52 = por %p50, %p51
      %p53 = scmp.ne.s32.totalorder %s42, %s43
      %p54 = scmp.eq.s32.totalorder %s20, 0
      %p55 = por %p53, %p54
      %p56 = scmp.ne.s32.totalorder %s42, %s43
      %p57 = scmp.eq.s32.totalorder %s21, 3
      %p58 = por %p56, %p57
      %p60 = scmp.ne.s32.totalorder %s43, %s59
      %p61 = scmp.eq.s32.totalorder %s21, 0
      %p62 = por %p60, %p61
      %s64 = sadd.s32 %s63, 1
      %p67 = scmp.eq.s32.totalorder %s15, 3
      %p68 = scmp.ne.s32.totalorder %s63, %s65
      %p69 = scmp.eq.s32.totalorder %s15, 0
      %p70 = por %p68, %p69
      %p71 = scmp.ne.s32.totalorder %s63, %s65
      %p72 = scmp.eq.s32.totalorder %s20, 3
      %p73 = por %p71, %p72
      %p74 = scmp.ne.s32.totalorder %s65, %s66
      %p75 = scmp.eq.s32.totalorder %s20, 0
      %p76 = por %p74, %p75
      %p77 = scmp.ne.s32.totalorder %s65, %s66
      %p78 = scmp.eq.s32.totalorder %s21, 3
      %p79 = por %p77, %p78
      %p81 = scmp.ne.s32.totalorder %s66, %s80
      %p82 = scmp.eq.s32.totalorder %s21, 0
      %p83 = por %p81, %p82
      %s85 = sadd.s32 %s84, 1
      %p88 = scmp.eq.s32.totalorder %s15, 3
      %p89 = scmp.ne.s32.totalorder %s84, %s86
      %p90 = scmp.eq.s32.totalorder %s15, 0
      %p91 = por %p89, %p90
      %p92 = scmp.ne.s32.totalorder %s84, %s86
      %p93 = scmp.eq.s32.totalorder %s20, 3
      %p94 = por %p92, %p93
      %p95 = scmp.ne.s32.totalorder %s86, %s87
      %p96 = scmp.eq.s32.totalorder %s20, 0
      %p97 = por %p95, %p96
      %p98 = scmp.ne.s32.totalorder %s86, %s87
      %p99 = scmp.eq.s32.totalorder %s21, 3
      %p100 = por %p98, %p99
      %p102 = scmp.ne.s32.totalorder %s87, %s101
      %p103 = scmp.eq.s32.totalorder %s21, 0
      %p104 = por %p102, %p103
      %s105 = ssub.s32 %s22, %s34
      %s106 = ssub.s32 %s23, %s30
      %s107 = sor.u32 %s105, %s106
      %p108 = scmp.eq.s32.totalorder %s107, 0
      %s110 = sadd.s32 %s109, 1
      %s111 = scalar_select %p108, %s109, %s110
      %p114 = pneg %p108
      %p115 = scmp.eq.s32.totalorder %s15, 3
      %p116 = por %p114, %p115
      %p117 = scmp.ne.s32.totalorder %s109, %s112
      %p118 = scmp.eq.s32.totalorder %s15, 0
      %p119 = por %p117, %p118
      %p120 = scmp.ne.s32.totalorder %s109, %s112
      %p121 = scmp.eq.s32.totalorder %s20, 3
      %p122 = por %p120, %p121
      %p123 = scmp.ne.s32.totalorder %s112, %s113
      %p124 = scmp.eq.s32.totalorder %s20, 0
      %p125 = por %p123, %p124
      %p126 = scmp.ne.s32.totalorder %s112, %s113
      %p127 = scmp.eq.s32.totalorder %s21, 3
      %p128 = por %p126, %p127
      %p130 = scmp.ne.s32.totalorder %s113, %s129
      %p131 = scmp.eq.s32.totalorder %s21, 0
      %p132 = por %p130, %p131
      %p133 = scmp.le.s32.totalorder 1, %s15
      %p134 = scmp.lt.s32.totalorder %s15, 5
      %p135 = pnand %p133, %p134
      %p136 = pneg %p135
      // Predicated region
      $region9: #{tpu_custom_call.1} parent=5 // pred_check
        _
      $region10: #{tpu_custom_call.1} parent=5 // pred_check_branch
        %138 = sbr.rel (%p135) target = $region12
      $region11: #{tpu_custom_call.1} parent=5 // pred_region
        %s139 = ssub.s32 %s15, 1
        // Predicated region
        $region13: #{tpu_custom_call.1} parent=11 // pred_check
          %p140 = pneg %p76
        $region14: #{tpu_custom_call.1} parent=11 // pred_check_branch
          %142 = sbr.rel (%p140) target = $region16
        $region15: #{tpu_custom_call.1} parent=11 // pred_region
          _
        $region16: #{tpu_custom_call.1} parent=11 // pred_fallthru
          _
        // Predicated region
        $region17: #{tpu_custom_call.1} parent=11 // pred_check
          %p143 = pneg %p97
        $region18: #{tpu_custom_call.1} parent=11 // pred_check_branch
          %145 = sbr.rel (%p143) target = $region20
        $region19: #{tpu_custom_call.1} parent=11 // pred_region
          _
        $region20: #{tpu_custom_call.1} parent=11 // pred_fallthru
          _
      $region12: #{tpu_custom_call.1} parent=5 // pred_fallthru
        _
      %p146 = scmp.lt.s32.totalorder %s15, 4
      // Predicated region
      $region21: #{tpu_custom_call.1} parent=5 // pred_check
        %p147 = pneg %p146
      $region22: #{tpu_custom_call.1} parent=5 // pred_check_branch
        %149 = sbr.rel (%p147) target = $region24
      $region23: #{tpu_custom_call.1} parent=5 // pred_region
        // Predicated region
        $region25: #{tpu_custom_call.1} parent=23 // pred_check
          %p150 = pneg %p49
        $region26: #{tpu_custom_call.1} parent=23 // pred_check_branch
          %152 = sbr.rel (%p150) target = $region28
        $region27: #{tpu_custom_call.1} parent=23 // pred_region
          %s153 = sand.u32 %s39, 1
          %s154 = scalar_lea.sflag [#allocation3], %s153
          %s155 = sand.u32 %s39, 1
          %s156 = smul.addr %s155, 4
          %s157 = scalar_lea.vmem [#allocation2], %s156
          %s159 = ssub.s32 64, 64
          %160 = vsyncadd %s154, %s159
          %s161 = smul.addr %s22, 2
          %s162 = sadd.s32 %s23, %s161
          %s163 = smul.addr %s162, 64
          %s164 = scalar_lea.hbm %s0, %s163
          %s166 = sshll.u32 %s157, 4
          %s167 = int_to_ptr.vmem [resolvable:$true] %s166
          %169 = dma.hbm_to_vmem [thread:$0]  %s164, 64, %s167, %s154
        $region28: #{tpu_custom_call.1} parent=23 // pred_fallthru
          _
      $region24: #{tpu_custom_call.1} parent=5 // pred_fallthru
        _
      %p170 = scmp.le.s32.totalorder 1, %s15
      %p171 = scmp.lt.s32.totalorder %s15, 5
      %p172 = pnand %p170, %p171
      %p173 = pneg %p172
      // Predicated region
      $region29: #{tpu_custom_call.1} parent=5 // pred_check
        _
      $region30: #{tpu_custom_call.1} parent=5 // pred_check_branch
        %175 = sbr.rel (%p172) target = $region32
      $region31: #{tpu_custom_call.1} parent=5 // pred_region
        %s176 = ssub.s32 %s15, 1
        %s177 = sand.u32 %s42, 1
        %s178 = scalar_lea.sflag [#allocation3], %s177
        %s179 = sand.u32 %s42, 1
        %s180 = smul.addr %s179, 4
        %s181 = scalar_lea.vmem [#allocation2], %s180
        // Predicated region
        $region33: #{tpu_custom_call.1} parent=31 // pred_check
          %p182 = pneg %p55
        $region34: #{tpu_custom_call.1} parent=31 // pred_check_branch
          %184 = sbr.rel (%p182) target = $region36
        $region35: #{tpu_custom_call.1} parent=31 // pred_region
          %185 = dma.done %s178, 64
        $region36: #{tpu_custom_call.1} parent=31 // pred_fallthru
          _
        %s186 = sand.u32 %s42, 1
        %s187 = scalar_lea.sflag [#allocation3], %s186
        %s188 = sand.u32 %s42, 1
        %s189 = smul.addr %s188, 4
        %s190 = scalar_lea.vmem [#allocation2], %s189
        %p191 = pneg %p55
        %p192 = pneg %p52
        %p193 = pneg %p76
        %p194 = pneg %p73
        %p195 = pneg %p97
        %p196 = pneg %p94
        %p197 = pneg %p125
        %p198 = pneg %p122
        %s199 = sand.u32 %s112, 1
        %s200 = scalar_lea.sflag [#allocation4], %s199
        %s201 = sand.u32 %s112, 1
        %s202 = smul.addr %s201, 4
        %s203 = scalar_lea.vmem [#allocation5], %s202
        %v204 = vld [vmem:[%s181] sm:$0xf]
        %vm205 = vcmask 1043456
        %v206 = vsel %vm205, %v204, 0.0
        %v207 = vrot.slane %v206, 4
        %v208 = vadd.f32 %v206, %v207
        %v209 = vrot.slane %v208, 2
        %v210 = vadd.f32 %v208, %v209
        %v211 = vrot.slane %v210, 1
        %v212 = vadd.f32 %v210, %v211
        %v213 = vrcp.pop 4.0
        %v214 = vmul.f32 %v212, %v213
        %v215 = vsub.f32 %v204, %v214
        %v216 = vmul.f32 %v215, %v215
        %v217 = vsel %vm205, %v216, 0.0
        %v218 = vrot.slane %v217, 4
        %v219 = vadd.f32 %v217, %v218
        %v220 = vrot.slane %v219, 2
        %v221 = vadd.f32 %v219, %v220
        %v222 = vrot.slane %v221, 1
        %v223 = vadd.f32 %v221, %v222
        %v224 = vmul.f32 %v223, %v213
        %v225 = vadd.f32 %v224, 1e-06
        %v226 = vrsqrt.pop %v225
        %v227 = vld [vmem:[%s1] sm:$0xf]
        %v228 = vld [vmem:[%s2] sm:$0xf]
        %v229 = vmul.f32 %v215, %v226
        %231 = vset.pattern.permute.xlu0 0
        %232 = vperm.xlu0 %231, %v227
        %v233 = vpop.permute.xlu0 %232
        %v235 = vmul.f32 %v229, %v233
        %237 = vset.pattern.permute.xlu0 0
        %238 = vperm.xlu0 %237, %v228
        %v239 = vpop.permute.xlu0 %238
        %v241 = vadd.f32 %v235, %v239
        %242 = vst [vmem:[%s203] sm:$0xf] %v241
        %s243 = sand.u32 %s112, 1
        %s244 = scalar_lea.sflag [#allocation4], %s243
        %s245 = sand.u32 %s112, 1
        %s246 = smul.addr %s245, 4
        %s247 = scalar_lea.vmem [#allocation5], %s246
        // Predicated region
        $region37: #{tpu_custom_call.1} parent=31 // pred_check
          %p248 = pneg %p122
        $region38: #{tpu_custom_call.1} parent=31 // pred_check_branch
          %250 = sbr.rel (%p248) target = $region40
        $region39: #{tpu_custom_call.1} parent=31 // pred_region
          %s252 = ssub.s32 64, 64
          %253 = vsyncadd %s244, %s252
          %s254 = smul.addr %s24, 2
          %s255 = sadd.s32 %s25, %s254
          %s256 = smul.addr %s255, 64
          %s257 = scalar_lea.hbm %s3, %s256
          %s259 = sshll.u32 %s247, 4
          %s260 = int_to_ptr.vmem [resolvable:$true] %s259
          %262 = dma.vmem_to_hbm [thread:$0]  %s260, 64, %s257, %s244
        $region40: #{tpu_custom_call.1} parent=31 // pred_fallthru
          _
      $region32: #{tpu_custom_call.1} parent=5 // pred_fallthru
        _
      %p263 = scmp.le.s32.totalorder 2, %s15
      // Predicated region
      $region41: #{tpu_custom_call.1} parent=5 // pred_check
        %p264 = pneg %p263
      $region42: #{tpu_custom_call.1} parent=5 // pred_check_branch
        %266 = sbr.rel (%p264) target = $region44
      $region43: #{tpu_custom_call.1} parent=5 // pred_region
        %s267 = ssub.s32 %s15, 2
        // Predicated region
        $region45: #{tpu_custom_call.1} parent=43 // pred_check
          %p268 = pneg %p128
        $region46: #{tpu_custom_call.1} parent=43 // pred_check_branch
          %270 = sbr.rel (%p268) target = $region48
        $region47: #{tpu_custom_call.1} parent=43 // pred_region
          %s271 = sand.u32 %s113, 1
          %s272 = scalar_lea.sflag [#allocation4], %s271
          %s273 = sand.u32 %s113, 1
          %s274 = smul.addr %s273, 4
          %s275 = scalar_lea.vmem [#allocation5], %s274
          %276 = dma.done %s272, 64
        $region48: #{tpu_custom_call.1} parent=43 // pred_fallthru
          _
      $region44: #{tpu_custom_call.1} parent=5 // pred_fallthru
        _
    $region6: #{tpu_custom_call.1} parent=1 // loop_footer
      %s19 = sadd.s32 1, %s15
    $region7: #{tpu_custom_call.1} parent=1 // loop_footer_branch
      %14 = sbr.rel target = $region3
    $region8: #{tpu_custom_call.1} parent=1 // loop_exit
      _
    %277 = vsyncpa [#allocation3], 1
    %s278 = scalar_lea.sflag [#allocation3], 1
    %279 = vsyncpa %s278, 1
    %280 = vsyncpa [#allocation4], 1
    %s281 = scalar_lea.sflag [#allocation4], 1
    %282 = vsyncpa %s281, 1

</llo_original>
